<compile_context>
chip_gen: v6e
topology: v6e:2x2x1
jax: 0.10.0
libtpu: 0.0.40
codegen_flags: <defaults>
</compile_context>

<pallas_src>
import functools

import jax
import jax.numpy as jnp
import numpy as np
from jax.experimental import pallas as pl
from jax.experimental.pallas import tpu as pltpu

_EPS = 1e-8          # epsilon in precision / recall / F1 denominators
_THRESHOLD = 0.5     # prediction binarization threshold
_NUM_CORE_SPLITS = 2  # v7x has 2 TensorCores; extra axis is a cheap serial loop elsewhere


def _round_up(x, m):
    return (x + m - 1) // m * m


def _vmem_limit_bytes():
    cap = 64 * 1024 * 1024                     # conservative default (v7x per-TC VMEM)
    try:
        cap = int(pltpu.get_tpu_info().vmem_capacity_bytes)
    except Exception:
        pass
    return min((cap // 4) * 3, 96 * 1024 * 1024)


def _f1_partials_kernel(p_ref, y_ref, out_ref,
                        tp_lab, pd_lab, y_lab, f1_sum, *bce_scratch,
                        bce, tn, n, c, needs_mask):
    """Per-core partial reduction.

    Blocks are natural-layout (tn, C): batch rows on sublanes, labels on lanes.
    Grid = (num_core_splits [parallel], tiles_per_core [arbitrary]).  Each core
    accumulates per-label tp / sum(pd) / sum(y), the sum of per-example F1 and
    (optionally) the BCE log-likelihood sum, then writes them to its own
    (1, nrows, C) output block in the finalize step.
    """
    core = pl.program_id(0)
    j = pl.program_id(1)
    tiles_per_core = pl.num_programs(1)
    bce_sum = bce_scratch[0] if bce else None

    @pl.when(j == 0)
    def _init():
        tp_lab[...] = jnp.zeros_like(tp_lab)
        pd_lab[...] = jnp.zeros_like(pd_lab)
        y_lab[...] = jnp.zeros_like(y_lab)
        f1_sum[...] = jnp.zeros_like(f1_sum)
        if bce:
            bce_sum[...] = jnp.zeros_like(bce_sum)

    p = p_ref[...].astype(jnp.float32)          # (tn, C)
    y = y_ref[...].astype(jnp.float32)

    if needs_mask:
        # Zero rows whose global batch index is past the true batch size
        # (ragged last tile and/or fully-duplicated clamped tile).
        t = core * tiles_per_core + j
        rows = jax.lax.broadcasted_iota(jnp.int32, (tn, c), 0) + t * tn
        valid = rows < n
        p = jnp.where(valid, p, 0.0)            # p=0 -> pd=0, log-term -> log(1)=0
        y = jnp.where(valid, y, 0.0)

    pd = (p >= _THRESHOLD).astype(jnp.float32)  # binarized predictions
    yp = y * pd                                 # hoisted once; reused everywhere

    # --- per-label partial counts (reduce over the sublane/batch axis) ---
    tp_lab[...] += jnp.sum(yp, axis=0, keepdims=True)   # (1, C)
    pd_lab[...] += jnp.sum(pd, axis=0, keepdims=True)
    y_lab[...] += jnp.sum(y, axis=0, keepdims=True)

    # --- per-example F1 for this tile (reduce over the lane/label axis) ---
    tp_ex = jnp.sum(yp, axis=1, keepdims=True)           # (tn, 1)
    pd_ex = jnp.sum(pd, axis=1, keepdims=True)
    y_ex = jnp.sum(y, axis=1, keepdims=True)
    prec = tp_ex / (pd_ex + _EPS)                         # exact division for parity
    rec = tp_ex / (y_ex + _EPS)
    f1_ex = 2.0 * prec * rec / (prec + rec + _EPS)        # masked rows contribute 0
    f1_sum[...] += jnp.sum(f1_ex, keepdims=True)          # (1, 1)

    if bce:
        # Single-log BCE (y binary): -log(p) if y==1 else -log(1-p), log clamped
        # at -100 like torch.  Masked rows: y=0, p=0 -> log(1) = 0 contribution.
        pc = jnp.where(y >= _THRESHOLD, p, 1.0 - p)
        bce_sum[...] += jnp.sum(jnp.maximum(jnp.log(pc), -100.0), keepdims=True)

    @pl.when(j == tiles_per_core - 1)
    def _finalize():
        out_ref[0, 0:1, :] = tp_lab[...]
        out_ref[0, 1:2, :] = pd_lab[...]
        out_ref[0, 2:3, :] = y_lab[...]
        out_ref[0, 3:4, :] = jnp.broadcast_to(f1_sum[...], (1, c))
        if bce:
            out_ref[0, 4:5, :] = jnp.broadcast_to(bce_sum[...], (1, c))


def f1_loss(p, y, *, bce=False, factor=1.0, block_n=4096):
    """Pallas equivalent of F1Loss(bce, factor).forward(p, y) -> scalar float32.

    p: (N, C) probabilities (float32 or bfloat16 -- pass bf16 to halve HBM traffic).
    y: (N, C) binary targets (float32 / bfloat16 / int8 / bool -- int8 is cheapest).
    """
    assert p.shape == y.shape and p.ndim == 2
    n, c = p.shape
    if y.dtype == jnp.bool_:
        y = y.astype(jnp.int8)   # bool not DMA-friendly; int8 keeps bytes minimal

    vmem_limit = _vmem_limit_bytes()
    tile_budget = vmem_limit // 2            # headroom for scratch / output / slack

    # Tile budget: 2 inputs x 2 pipeline buffers (lane-padded to 128) plus ~8 live
    # (tn, c_pad) f32 in-kernel temporaries (p, y, pd, yp, mask, bce terms, ...).
    c_pad = _round_up(c, 128)
    bytes_per_row = c_pad * (2 * (p.dtype.itemsize + y.dtype.itemsize) + 8 * 4)
    max_tn = max(8, (tile_budget // bytes_per_row) // 8 * 8)
    if n < 8:
        tn = n                               # block equals full batch dim
    else:
        tn = max(8, min(block_n, max_tn, (n // 8) * 8))

    n_tiles = -(-n // tn)
    num_cores = _NUM_CORE_SPLITS if n_tiles > 1 else 1
    tiles_per_core = -(-n_tiles // num_cores)
    needs_mask = (n % tn != 0) or (num_cores * tiles_per_core != n_tiles)
    nrows = 5 if bce else 4

    def in_map(core, j):
        # Clamp so a surplus tile (odd tile count split over 2 cores) never DMAs
        # out of bounds; its contribution is zeroed by the in-kernel row mask.
        t = core * tiles_per_core + j
        return (jnp.minimum(t, n_tiles - 1), 0)

    kernel = functools.partial(_f1_partials_kernel, bce=bce, tn=tn, n=n, c=c,
                               needs_mask=needs_mask)

    scratch = [
        pltpu.VMEM((1, c), jnp.float32),   # per-label tp accumulator
        pltpu.VMEM((1, c), jnp.float32),   # per-label sum(pd) accumulator
        pltpu.VMEM((1, c), jnp.float32),   # per-label sum(y) accumulator
        pltpu.VMEM((1, 1), jnp.float32),   # sum of per-example F1
    ]
    if bce:
        scratch.append(pltpu.VMEM((1, 1), jnp.float32))   # BCE log-likelihood sum

    parts = pl.pallas_call(
        kernel,
        out_shape=jax.ShapeDtypeStruct((num_cores, nrows, c), jnp.float32),
        grid_spec=pltpu.PrefetchScalarGridSpec(
            num_scalar_prefetch=0,
            grid=(num_cores, tiles_per_core),
            in_specs=[
                pl.BlockSpec((tn, c), in_map),
                pl.BlockSpec((tn, c), in_map),
            ],
            out_specs=pl.BlockSpec((1, nrows, c), lambda core, j: (core, 0, 0)),
            scratch_shapes=scratch,
        ),
        compiler_params=pltpu.CompilerParams(
            dimension_semantics=("parallel", "arbitrary"),
            vmem_limit_bytes=vmem_limit,
        ),
    )(p, y)

    # --- tiny O(C) finalize in plain JAX (combines the per-core partials) ---
    tp = jnp.sum(parts[:, 0, :], axis=0)          # (C,)
    pd_tot = jnp.sum(parts[:, 1, :], axis=0)
    y_tot = jnp.sum(parts[:, 2, :], axis=0)
    f1ex_sum = jnp.sum(parts[:, 3, 0])

    prec_l = tp / (pd_tot + _EPS)
    rec_l = tp / (y_tot + _EPS)
    ma_f1 = jnp.mean(2.0 * prec_l * rec_l / (prec_l + rec_l + _EPS))

    tp_m = jnp.sum(tp)
    pd_m = jnp.sum(pd_tot)
    y_m = jnp.sum(y_tot)
    prec_mi = tp_m / (pd_m + _EPS)
    rec_mi = tp_m / (y_m + _EPS)
    mi_f1 = 2.0 * prec_mi * rec_mi / (prec_mi + rec_mi + _EPS)

    ex_f1 = f1ex_sum / n
    floss = 3.0 - ex_f1 - ma_f1 - mi_f1
    if bce:
        oloss = -jnp.sum(parts[:, 4, 0]) / (n * c)
        floss = oloss + floss * float(factor)
    return floss.astype(jnp.float32)


def _reference_f1_loss(p, y, *, bce, factor):
    """Pure-JAX reference mirroring the PyTorch F1Loss semantics."""
    p = p.astype(jnp.float32)
    y = y.astype(jnp.float32)
    pd = (p >= _THRESHOLD).astype(jnp.float32)

    tp_ex = jnp.sum(y * pd, axis=1)
    prec = tp_ex / (jnp.sum(pd, axis=1) + _EPS)
    rec = tp_ex / (jnp.sum(y, axis=1) + _EPS)
    ex_f1 = jnp.mean(2 * prec * rec / (prec + rec + _EPS))

    tp_l = jnp.sum(y * pd, axis=0)
    prec_l = tp_l / (jnp.sum(pd, axis=0) + _EPS)
    rec_l = tp_l / (jnp.sum(y, axis=0) + _EPS)
    ma_f1 = jnp.mean(2 * prec_l * rec_l / (prec_l + rec_l + _EPS))

    tp_m = jnp.sum(tp_l)
    prec_m = tp_m / (jnp.sum(pd) + _EPS)
    rec_m = tp_m / (jnp.sum(y) + _EPS)
    mi_f1 = 2 * prec_m * rec_m / (prec_m + rec_m + _EPS)

    floss = 3.0 - ex_f1 - ma_f1 - mi_f1
    if bce:
        ll = jnp.maximum(jnp.log(jnp.where(y >= _THRESHOLD, p, 1.0 - p)), -100.0)
        floss = -jnp.mean(ll) + floss * float(factor)
    return floss


if __name__ == "__main__":
    key = jax.random.PRNGKey(0)
    kp, ky, kp2, ky2 = jax.random.split(key, 4)

    def check(name, got, want, tol=2e-4):
        g = np.asarray(got, dtype=np.float64)
        w = np.asarray(want, dtype=np.float64)
        if not np.allclose(g, w, rtol=tol, atol=tol):
            raise AssertionError(f"{name}: kernel={g} ref={w}")

    # batch of 8 samples x 16 multilabel classes
    N, C = 8, 16
    p = jax.random.uniform(kp, (N, C), jnp.float32, minval=0.01, maxval=0.99)
    y = (jax.random.uniform(ky, (N, C)) > 0.5).astype(jnp.float32)

    # plain floss (F1Loss(bce=False))
    loss = f1_loss(p, y, bce=False)
    jax.block_until_ready(loss)
    check("floss", loss, _reference_f1_loss(p, y, bce=False, factor=1.0))

    # bce branch (F1Loss(bce=True, factor=1.0))
    loss_bce = f1_loss(p, y, bce=True, factor=1.0)
    jax.block_until_ready(loss_bce)
    check("bce", loss_bce, _reference_f1_loss(p, y, bce=True, factor=1.0))

    # narrow-dtype path straight through the kernel: bf16 probabilities, int8 targets
    loss_lowp = f1_loss(p.astype(jnp.bfloat16), y.astype(jnp.int8), bce=True, factor=0.5)
    jax.block_until_ready(loss_lowp)
    check("lowp", loss_lowp,
          _reference_f1_loss(p.astype(jnp.bfloat16).astype(jnp.float32), y,
                             bce=True, factor=0.5))

    # ragged batch: exercises the in-kernel row mask, the 2-way core split and
    # the clamped index_map for an odd tile count (3 tiles over 2 cores).
    N2, C2 = 40, 10
    p2 = jax.random.uniform(kp2, (N2, C2), jnp.float32, minval=0.01, maxval=0.99)
    y2 = (jax.random.uniform(ky2, (N2, C2)) > 0.5).astype(jnp.float32)
    loss2 = f1_loss(p2, y2, bce=True, factor=1.0, block_n=16)
    jax.block_until_ready(loss2)
    check("ragged", loss2, _reference_f1_loss(p2, y2, bce=True, factor=1.0))

    print("KERNEL_OK")
</pallas_src>

<mosaic_0001>
module attributes {stable_mosaic.version = 11 : i64} {
  func.func @_f1_partials_kernel(%arg0: i32, %arg1: i32, %arg2: memref<8x16xf32, #tpu.memory_space<vmem>>, %arg3: memref<8x16xf32, #tpu.memory_space<vmem>>, %arg4: memref<1x4x16xf32, #tpu.memory_space<vmem>>, %arg5: memref<1x16xf32, #tpu.memory_space<vmem>>, %arg6: memref<1x16xf32, #tpu.memory_space<vmem>>, %arg7: memref<1x16xf32, #tpu.memory_space<vmem>>, %arg8: memref<1x1xf32, #tpu.memory_space<vmem>>) attributes {dimension_semantics = [#tpu.dimension_semantics<parallel>, #tpu.dimension_semantics<arbitrary>], iteration_bounds = array<i64: 1, 1>, scalar_prefetch = 0 : i64, scratch_operands = 4 : i64, tpu.core_type = #tpu.core_type<tc>, window_params = [{transform_indices = @transform_0, window_bounds = array<i64: 8, 16>}, {transform_indices = @transform_1, window_bounds = array<i64: 8, 16>}, {transform_indices = @transform_2, window_bounds = array<i64: 1, 4, 16>}]} {
    %c0_i32 = arith.constant 0 : i32
    %0 = arith.cmpi eq, %arg1, %c0_i32 : i32
    %1 = arith.extui %0 : i1 to i32
    %c0_i32_0 = arith.constant 0 : i32
    %2 = arith.cmpi ne, %1, %c0_i32_0 : i32
    scf.if %2 {
      %cst_33 = arith.constant 0.000000e+00 : f32
      %55 = vector.broadcast %cst_33 : f32 to vector<1x16xf32>
      %c0_34 = arith.constant 0 : index
      %c0_35 = arith.constant 0 : index
      %56 = vector.load %arg5[%c0_34, %c0_35] : memref<1x16xf32, #tpu.memory_space<vmem>>, vector<1x16xf32>
      tpu.vector_store %arg5[%c0_34, %c0_35], %55 {strides = array<i32>} : memref<1x16xf32, #tpu.memory_space<vmem>>, vector<1x16xf32>,
      %cst_36 = arith.constant 0.000000e+00 : f32
      %57 = vector.broadcast %cst_36 : f32 to vector<1x16xf32>
      %c0_37 = arith.constant 0 : index
      %c0_38 = arith.constant 0 : index
      %58 = vector.load %arg6[%c0_37, %c0_38] : memref<1x16xf32, #tpu.memory_space<vmem>>, vector<1x16xf32>
      tpu.vector_store %arg6[%c0_37, %c0_38], %57 {strides = array<i32>} : memref<1x16xf32, #tpu.memory_space<vmem>>, vector<1x16xf32>,
      %cst_39 = arith.constant 0.000000e+00 : f32
      %59 = vector.broadcast %cst_39 : f32 to vector<1x16xf32>
      %c0_40 = arith.constant 0 : index
      %c0_41 = arith.constant 0 : index
      %60 = vector.load %arg7[%c0_40, %c0_41] : memref<1x16xf32, #tpu.memory_space<vmem>>, vector<1x16xf32>
      tpu.vector_store %arg7[%c0_40, %c0_41], %59 {strides = array<i32>} : memref<1x16xf32, #tpu.memory_space<vmem>>, vector<1x16xf32>,
      %cst_42 = arith.constant 0.000000e+00 : f32
      %61 = vector.broadcast %cst_42 : f32 to vector<1x1xf32>
      %c0_43 = arith.constant 0 : index
      %c0_44 = arith.constant 0 : index
      %62 = vector.load %arg8[%c0_43, %c0_44] : memref<1x1xf32, #tpu.memory_space<vmem>>, vector<1x1xf32>
      tpu.vector_store %arg8[%c0_43, %c0_44], %61 {strides = array<i32>} : memref<1x1xf32, #tpu.memory_space<vmem>>, vector<1x1xf32>,
    } else {
    }
    %c0 = arith.constant 0 : index
    %c0_1 = arith.constant 0 : index
    %3 = vector.load %arg2[%c0, %c0_1] : memref<8x16xf32, #tpu.memory_space<vmem>>, vector<8x16xf32>
    %c0_2 = arith.constant 0 : index
    %c0_3 = arith.constant 0 : index
    %4 = vector.load %arg3[%c0_2, %c0_3] : memref<8x16xf32, #tpu.memory_space<vmem>>, vector<8x16xf32>
    %cst = arith.constant 5.000000e-01 : f32
    %5 = vector.broadcast %cst : f32 to vector<8x16xf32>
    %6 = arith.cmpf oge, %3, %5 : vector<8x16xf32>
    %7 = arith.extui %6 : vector<8x16xi1> to vector<8x16xi32>
    %8 = arith.sitofp %7 : vector<8x16xi32> to vector<8x16xf32>
    %9 = arith.mulf %4, %8 : vector<8x16xf32>
    %c0_4 = arith.constant 0 : index
    %c0_5 = arith.constant 0 : index
    %10 = vector.load %arg5[%c0_4, %c0_5] : memref<1x16xf32, #tpu.memory_space<vmem>>, vector<1x16xf32>
    %cst_6 = arith.constant dense<0.000000e+00> : vector<16xf32>
    %11 = vector.multi_reduction <add>, %9, %cst_6 [0] : vector<8x16xf32> to vector<16xf32>
    %12 = vector.shape_cast %11 : vector<16xf32> to vector<1x16xf32>
    %13 = arith.addf %10, %12 : vector<1x16xf32>
    %c0_7 = arith.constant 0 : index
    %c0_8 = arith.constant 0 : index
    %14 = vector.load %arg5[%c0_7, %c0_8] : memref<1x16xf32, #tpu.memory_space<vmem>>, vector<1x16xf32>
    tpu.vector_store %arg5[%c0_7, %c0_8], %13 {strides = array<i32>} : memref<1x16xf32, #tpu.memory_space<vmem>>, vector<1x16xf32>,
    %c0_9 = arith.constant 0 : index
    %c0_10 = arith.constant 0 : index
    %15 = vector.load %arg6[%c0_9, %c0_10] : memref<1x16xf32, #tpu.memory_space<vmem>>, vector<1x16xf32>
    %cst_11 = arith.constant dense<0.000000e+00> : vector<16xf32>
    %16 = vector.multi_reduction <add>, %8, %cst_11 [0] : vector<8x16xf32> to vector<16xf32>
    %17 = vector.shape_cast %16 : vector<16xf32> to vector<1x16xf32>
    %18 = arith.addf %15, %17 : vector<1x16xf32>
    %c0_12 = arith.constant 0 : index
    %c0_13 = arith.constant 0 : index
    %19 = vector.load %arg6[%c0_12, %c0_13] : memref<1x16xf32, #tpu.memory_space<vmem>>, vector<1x16xf32>
    tpu.vector_store %arg6[%c0_12, %c0_13], %18 {strides = array<i32>} : memref<1x16xf32, #tpu.memory_space<vmem>>, vector<1x16xf32>,
    %c0_14 = arith.constant 0 : index
    %c0_15 = arith.constant 0 : index
    %20 = vector.load %arg7[%c0_14, %c0_15] : memref<1x16xf32, #tpu.memory_space<vmem>>, vector<1x16xf32>
    %cst_16 = arith.constant dense<0.000000e+00> : vector<16xf32>
    %21 = vector.multi_reduction <add>, %4, %cst_16 [0] : vector<8x16xf32> to vector<16xf32>
    %22 = vector.shape_cast %21 : vector<16xf32> to vector<1x16xf32>
    %23 = arith.addf %20, %22 : vector<1x16xf32>
    %c0_17 = arith.constant 0 : index
    %c0_18 = arith.constant 0 : index
    %24 = vector.load %arg7[%c0_17, %c0_18] : memref<1x16xf32, #tpu.memory_space<vmem>>, vector<1x16xf32>
    tpu.vector_store %arg7[%c0_17, %c0_18], %23 {strides = array<i32>} : memref<1x16xf32, #tpu.memory_space<vmem>>, vector<1x16xf32>,
    %cst_19 = arith.constant dense<0.000000e+00> : vector<8xf32>
    %25 = vector.multi_reduction <add>, %9, %cst_19 [1] : vector<8x16xf32> to vector<8xf32>
    %26 = vector.shape_cast %25 : vector<8xf32> to vector<8x1xf32>
    %cst_20 = arith.constant dense<0.000000e+00> : vector<8xf32>
    %27 = vector.multi_reduction <add>, %8, %cst_20 [1] : vector<8x16xf32> to vector<8xf32>
    %28 = vector.shape_cast %27 : vector<8xf32> to vector<8x1xf32>
    %cst_21 = arith.constant dense<0.000000e+00> : vector<8xf32>
    %29 = vector.multi_reduction <add>, %4, %cst_21 [1] : vector<8x16xf32> to vector<8xf32>
    %30 = vector.shape_cast %29 : vector<8xf32> to vector<8x1xf32>
    %cst_22 = arith.constant 9.99999993E-9 : f32
    %31 = vector.broadcast %cst_22 : f32 to vector<8x1xf32>
    %32 = arith.addf %28, %31 : vector<8x1xf32>
    %33 = arith.divf %26, %32 : vector<8x1xf32>
    %cst_23 = arith.constant 9.99999993E-9 : f32
    %34 = vector.broadcast %cst_23 : f32 to vector<8x1xf32>
    %35 = arith.addf %30, %34 : vector<8x1xf32>
    %36 = arith.divf %26, %35 : vector<8x1xf32>
    %cst_24 = arith.constant 2.000000e+00 : f32
    %37 = vector.broadcast %cst_24 : f32 to vector<8x1xf32>
    %38 = arith.mulf %37, %33 : vector<8x1xf32>
    %39 = arith.mulf %38, %36 : vector<8x1xf32>
    %40 = arith.addf %33, %36 : vector<8x1xf32>
    %cst_25 = arith.constant 9.99999993E-9 : f32
    %41 = vector.broadcast %cst_25 : f32 to vector<8x1xf32>
    %42 = arith.addf %40, %41 : vector<8x1xf32>
    %43 = arith.divf %39, %42 : vector<8x1xf32>
    %c0_26 = arith.constant 0 : index
    %c0_27 = arith.constant 0 : index
    %44 = vector.load %arg8[%c0_26, %c0_27] : memref<1x1xf32, #tpu.memory_space<vmem>>, vector<1x1xf32>
    %45 = vector.shape_cast %43 : vector<8x1xf32> to vector<1x8x1xf32>
    %cst_28 = arith.constant dense<0.000000e+00> : vector<1xf32>
    %46 = vector.multi_reduction <add>, %45, %cst_28 [1, 2] : vector<1x8x1xf32> to vector<1xf32>
    %47 = vector.shape_cast %46 : vector<1xf32> to vector<1x1x1xf32>
    %48 = vector.extract %47[0, 0, 0] : f32 from vector<1x1x1xf32>
    %49 = vector.broadcast %48 : f32 to vector<1x1xf32>
    %50 = arith.addf %44, %49 : vector<1x1xf32>
    %c0_29 = arith.constant 0 : index
    %c0_30 = arith.constant 0 : index
    %51 = vector.load %arg8[%c0_29, %c0_30] : memref<1x1xf32, #tpu.memory_space<vmem>>, vector<1x1xf32>
    tpu.vector_store %arg8[%c0_29, %c0_30], %50 {strides = array<i32>} : memref<1x1xf32, #tpu.memory_space<vmem>>, vector<1x1xf32>,
    %c0_i32_31 = arith.constant 0 : i32
    %52 = arith.cmpi eq, %arg1, %c0_i32_31 : i32
    %53 = arith.extui %52 : i1 to i32
    %c0_i32_32 = arith.constant 0 : i32
    %54 = arith.cmpi ne, %53, %c0_i32_32 : i32
    scf.if %54 {
      %c0_33 = arith.constant 0 : index
      %c0_34 = arith.constant 0 : index
      %55 = vector.load %arg5[%c0_33, %c0_34] : memref<1x16xf32, #tpu.memory_space<vmem>>, vector<1x16xf32>
      %c0_35 = arith.constant 0 : index
      %c0_36 = arith.constant 0 : index
      %c0_37 = arith.constant 0 : index
      %56 = vector.load %arg4[%c0_35, %c0_36, %c0_37] : memref<1x4x16xf32, #tpu.memory_space<vmem>>, vector<1x1x16xf32>
      %57 = vector.shape_cast %56 : vector<1x1x16xf32> to vector<1x16xf32>
      %58 = vector.shape_cast %55 : vector<1x16xf32> to vector<1x1x16xf32>
      tpu.vector_store %arg4[%c0_35, %c0_36, %c0_37], %58 {strides = array<i32>} : memref<1x4x16xf32, #tpu.memory_space<vmem>>, vector<1x1x16xf32>,
      %c0_38 = arith.constant 0 : index
      %c0_39 = arith.constant 0 : index
      %59 = vector.load %arg6[%c0_38, %c0_39] : memref<1x16xf32, #tpu.memory_space<vmem>>, vector<1x16xf32>
      %c0_40 = arith.constant 0 : index
      %c1 = arith.constant 1 : index
      %c0_41 = arith.constant 0 : index
      %60 = vector.load %arg4[%c0_40, %c1, %c0_41] : memref<1x4x16xf32, #tpu.memory_space<vmem>>, vector<1x1x16xf32>
      %61 = vector.shape_cast %60 : vector<1x1x16xf32> to vector<1x16xf32>
      %62 = vector.shape_cast %59 : vector<1x16xf32> to vector<1x1x16xf32>
      tpu.vector_store %arg4[%c0_40, %c1, %c0_41], %62 {strides = array<i32>} : memref<1x4x16xf32, #tpu.memory_space<vmem>>, vector<1x1x16xf32>,
      %c0_42 = arith.constant 0 : index
      %c0_43 = arith.constant 0 : index
      %63 = vector.load %arg7[%c0_42, %c0_43] : memref<1x16xf32, #tpu.memory_space<vmem>>, vector<1x16xf32>
      %c0_44 = arith.constant 0 : index
      %c2 = arith.constant 2 : index
      %c0_45 = arith.constant 0 : index
      %64 = vector.load %arg4[%c0_44, %c2, %c0_45] : memref<1x4x16xf32, #tpu.memory_space<vmem>>, vector<1x1x16xf32>
      %65 = vector.shape_cast %64 : vector<1x1x16xf32> to vector<1x16xf32>
      %66 = vector.shape_cast %63 : vector<1x16xf32> to vector<1x1x16xf32>
      tpu.vector_store %arg4[%c0_44, %c2, %c0_45], %66 {strides = array<i32>} : memref<1x4x16xf32, #tpu.memory_space<vmem>>, vector<1x1x16xf32>,
      %c0_46 = arith.constant 0 : index
      %c0_47 = arith.constant 0 : index
      %67 = vector.load %arg8[%c0_46, %c0_47] : memref<1x1xf32, #tpu.memory_space<vmem>>, vector<1x1xf32>
      %68 = vector.shape_cast %67 : vector<1x1xf32> to vector<1x1xf32>
      %69 = vector.broadcast %68 : vector<1x1xf32> to vector<1x16xf32>
      %c0_48 = arith.constant 0 : index
      %c3 = arith.constant 3 : index
      %c0_49 = arith.constant 0 : index
      %70 = vector.load %arg4[%c0_48, %c3, %c0_49] : memref<1x4x16xf32, #tpu.memory_space<vmem>>, vector<1x1x16xf32>
      %71 = vector.shape_cast %70 : vector<1x1x16xf32> to vector<1x16xf32>
      %72 = vector.shape_cast %69 : vector<1x16xf32> to vector<1x1x16xf32>
      tpu.vector_store %arg4[%c0_48, %c3, %c0_49], %72 {strides = array<i32>} : memref<1x4x16xf32, #tpu.memory_space<vmem>>, vector<1x1x16xf32>,
    } else {
    }
    return
  }
  func.func @transform_0(%arg0: i32, %arg1: i32) -> (i32, i32) {
    %c1_i32 = arith.constant 1 : i32
    %0 = arith.muli %arg0, %c1_i32 : i32
    %1 = arith.addi %0, %arg1 : i32
    %c0_i32 = arith.constant 0 : i32
    %2 = arith.minsi %1, %c0_i32 : i32
    %c0_i32_0 = arith.constant 0 : i32
    %c0_i32_1 = arith.constant 0 : i32
    return %2, %c0_i32_0 : i32, i32
  }
  func.func @transform_1(%arg0: i32, %arg1: i32) -> (i32, i32) {
    %c1_i32 = arith.constant 1 : i32
    %0 = arith.muli %arg0, %c1_i32 : i32
    %1 = arith.addi %0, %arg1 : i32
    %c0_i32 = arith.constant 0 : i32
    %2 = arith.minsi %1, %c0_i32 : i32
    %c0_i32_0 = arith.constant 0 : i32
    %c0_i32_1 = arith.constant 0 : i32
    return %2, %c0_i32_0 : i32, i32
  }
  func.func @transform_2(%arg0: i32, %arg1: i32) -> (i32, i32, i32) {
    %c0_i32 = arith.constant 0 : i32
    %c0_i32_0 = arith.constant 0 : i32
    %c0_i32_1 = arith.constant 0 : i32
    return %arg0, %c0_i32, %c0_i32_0 : i32, i32, i32
  }
}

</mosaic_0001>

<llo_original>
// kernel: tpu_custom_call.1
$region0: #{tpu_custom_call.1}
  #allocation0 [shape = 'u32[]', space=smem, size = 0x4, offset = 0x4, fixed_abs, tag = 'smem constant byte address 0x4 - core index']
  #allocation1 [shape = 'u32[144,128]{1,0:T(1,128)}', space=vmem, size = 0x12000, scoped, tag = 'internal scratch']
  #allocation2 [shape = 'f32[1,16]{1,0:T(1,128)}', space=vmem, size = 0x200, scoped, tag = 'scratch operand']
  #allocation3 [shape = 'f32[1,16]{1,0:T(1,128)}', space=vmem, size = 0x200, scoped, tag = 'scratch operand']
  #allocation4 [shape = 'f32[1,16]{1,0:T(1,128)}', space=vmem, size = 0x200, scoped, tag = 'scratch operand']
  #allocation5 [shape = 'f32[1,1]{1,0:T(1,128)}', space=vmem, size = 0x200, scoped, tag = 'scratch operand']
  %s0 = inlined_call_operand.hbm [shape: f32[8,16], index: 0, kind: input, shape index: {}]
  %s1 = inlined_call_operand.hbm [shape: f32[8,16], index: 1, kind: input, shape index: {}]
  %s2 = inlined_call_operand.hbm [shape: f32[1,4,16], index: 2, kind: output, shape index: {}]
  %s3 = sld [smem:[#allocation0]]
  $region34: #{tpu_custom_call.1} parent=0
    _
  %s5 = ssub.s32 1, %s3
  %s6 = scalar_select 0, %s5, %s3
  $region1: #{tpu_custom_call.1} parent=0
    #allocation6 [shape = 'u8[4096]{0}', space=vmem, size = 0x1000, scoped, tag = 'input window, operand 0, single buffered']
    #allocation7 [shape = 's32[1]{0}', space=sflag, size = 0x4, scoped, tag = 'scoped memory for tpu_custom_call.1']
    #allocation8 [shape = 's32[1]{0}', space=sflag, size = 0x4, scoped, tag = 'scoped memory for tpu_custom_call.1']
    #allocation9 [shape = 'u8[4096]{0}', space=vmem, size = 0x1000, scoped, tag = 'input window, operand 1, single buffered']
    #allocation10 [shape = 's32[1]{0}', space=sflag, size = 0x4, scoped, tag = 'scoped memory for tpu_custom_call.1']
    #allocation11 [shape = 'u8[2048]{0}', space=vmem, size = 0x800, scoped, tag = 'output window, operand 0, single buffered']
    %7 = vsyncpa [#allocation7], 0
    %8 = vsyncpa [#allocation10], 0
    %9 = vsyncpa [#allocation8], 0
    // Predicated region
    $region2: #{tpu_custom_call.1} parent=1 // pred_check
      _
    $region3: #{tpu_custom_call.1} parent=1 // pred_check_branch
      %11 = sbr.rel (0) target = $region5
    $region4: #{tpu_custom_call.1} parent=1 // pred_region
      %s12 = sadd.s32 0, 0
      %p13 = scmp.lt.s32.totalorder %s12, 0
      %s14 = scalar_select %p13, %s12, 0
      %s16 = ssub.s32 128, 128
      %17 = vsyncadd [#allocation7], %s16
      %s18 = smul.addr %s14, 128
      %s19 = scalar_lea.hbm %s0, %s18
      %s21 = sshll.u32 [#allocation6], 4
      %s22 = int_to_ptr.vmem [resolvable:$true] %s21
      %24 = dma.hbm_to_vmem [thread:$0]  %s19, 128, %s22, [#allocation7]
    $region5: #{tpu_custom_call.1} parent=1 // pred_fallthru
      _
    // Predicated region
    $region6: #{tpu_custom_call.1} parent=1 // pred_check
      _
    $region7: #{tpu_custom_call.1} parent=1 // pred_check_branch
      %26 = sbr.rel (0) target = $region9
    $region8: #{tpu_custom_call.1} parent=1 // pred_region
      %s27 = sadd.s32 0, 0
      %p28 = scmp.lt.s32.totalorder %s27, 0
      %s29 = scalar_select %p28, %s27, 0
      %s31 = ssub.s32 128, 128
      %32 = vsyncadd [#allocation10], %s31
      %s33 = smul.addr %s29, 128
      %s34 = scalar_lea.hbm %s1, %s33
      %s36 = sshll.u32 [#allocation9], 4
      %s37 = int_to_ptr.vmem [resolvable:$true] %s36
      %39 = dma.hbm_to_vmem [thread:$0]  %s34, 128, %s37, [#allocation10]
    $region9: #{tpu_custom_call.1} parent=1 // pred_fallthru
      _
    // Predicated region
    $region10: #{tpu_custom_call.1} parent=1 // pred_check
      _
    $region11: #{tpu_custom_call.1} parent=1 // pred_check_branch
      %41 = sbr.rel (0) target = $region13
    $region12: #{tpu_custom_call.1} parent=1 // pred_region
      %42 = dma.done [#allocation7], 128
    $region13: #{tpu_custom_call.1} parent=1 // pred_fallthru
      _
    // Predicated region
    $region14: #{tpu_custom_call.1} parent=1 // pred_check
      _
    $region15: #{tpu_custom_call.1} parent=1 // pred_check_branch
      %44 = sbr.rel (0) target = $region17
    $region16: #{tpu_custom_call.1} parent=1 // pred_region
      %45 = dma.done [#allocation10], 128
    $region17: #{tpu_custom_call.1} parent=1 // pred_fallthru
      _
    %s46 = sadd.s32 0, 0
    %p47 = scmp.lt.s32.totalorder %s46, 0
    %s48 = scalar_select %p47, %s46, 0
    %s49 = sadd.s32 0, 0
    %p50 = scmp.lt.s32.totalorder %s49, 0
    %s51 = scalar_select %p50, %s49, 0
    %p52 = scmp.eq.s32.totalorder 0, 0
    // Predicated region
    $region18: #{tpu_custom_call.1} parent=1 // pred_check
      %p53 = pneg %p52
    $region19: #{tpu_custom_call.1} parent=1 // pred_check_branch
      %55 = sbr.rel (%p53) target = $region21
    $region20: #{tpu_custom_call.1} parent=1 // pred_region
      %vm56 = vcmask 122880
      %57 = vst.msk [vmem:[#allocation2] sm:$0x1] %vm56, 0.0
      %58 = vst.msk [vmem:[#allocation3] sm:$0x1] %vm56, 0.0
      %59 = vst.msk [vmem:[#allocation4] sm:$0x1] %vm56, 0.0
      %vm60 = vcmask 0
      %61 = vst.msk [vmem:[#allocation5] sm:$0x1] %vm60, 0.0
    $region21: #{tpu_custom_call.1} parent=1 // pred_fallthru
      _
    %v62 = vld [vmem:[#allocation6] sm:$0xff]
    %v63 = vld [vmem:[#allocation9] sm:$0xff]
    %vm64 = vcmp.ge.f32.partialorder %v62, 0.5
    %v65 = vsel %vm64, 1, 0
    %v66 = vcvt.s32.f32 %v65
    %v67 = vmul.f32 %v63, %v66
    %v68 = vld [vmem:[#allocation2] sm:$0x1]
    %vm69 = vcmask 130048
    %v70 = vsel %vm69, %v67, 0.0
    %v71 = vrot.slane %v70, 4
    %v72 = vadd.f32 %v70, %v71
    %v73 = vrot.slane %v72, 2
    %v74 = vadd.f32 %v72, %v73
    %v75 = vrot.slane %v74, 1
    %v76 = vadd.f32 %v74, %v75
    %v77 = vadd.f32 %v68, %v76
    %vm78 = vcmask 122880
    %79 = vst.msk [vmem:[#allocation2] sm:$0x1] %vm78, %v77
    %v80 = vld [vmem:[#allocation3] sm:$0x1]
    %v81 = vsel %vm69, %v66, 0.0
    %v82 = vrot.slane %v81, 4
    %v83 = vadd.f32 %v81, %v82
    %v84 = vrot.slane %v83, 2
    %v85 = vadd.f32 %v83, %v84
    %v86 = vrot.slane %v85, 1
    %v87 = vadd.f32 %v85, %v86
    %v88 = vadd.f32 %v80, %v87
    %89 = vst.msk [vmem:[#allocation3] sm:$0x1] %vm78, %v88
    %v90 = vld [vmem:[#allocation4] sm:$0x1]
    %v91 = vsel %vm69, %v63, 0.0
    %v92 = vrot.slane %v91, 4
    %v93 = vadd.f32 %v91, %v92
    %v94 = vrot.slane %v93, 2
    %v95 = vadd.f32 %v93, %v94
    %v96 = vrot.slane %v95, 1
    %v97 = vadd.f32 %v95, %v96
    %v98 = vadd.f32 %v90, %v97
    %99 = vst.msk [vmem:[#allocation4] sm:$0x1] %vm78, %v98
    %100 = vadd.xlane.f32.xlu0 %v70
    %v101 = vpop.xlane.xlu0 %100
    %102 = vadd.xlane.f32.xlu0 %v81
    %v103 = vpop.xlane.xlu0 %102
    %104 = vadd.xlane.f32.xlu0 %v91
    %v105 = vpop.xlane.xlu0 %104
    %v106 = vadd.f32 %v103, 1e-08
    %v107 = vrcp.pop %v106
    %v108 = vmul.f32 %v101, %v107
    %v109 = vadd.f32 %v105, 1e-08
    %v110 = vrcp.pop %v109
    %v111 = vmul.f32 %v101, %v110
    %v112 = vmul.f32 %v108, 2.0
    %v113 = vmul.f32 %v112, %v111
    %v114 = vadd.f32 %v108, %v111
    %v115 = vadd.f32 %v114, 1e-08
    %v116 = vrcp.pop %v115
    %v117 = vmul.f32 %v113, %v116
    %v118 = vld [vmem:[#allocation5] sm:$0x1]
    %vm119 = vcmask 7168
    %v120 = vsel %vm119, %v117, 0.0
    %121 = vadd.xlane.f32.xlu0 %v120
    %v122 = vpop.xlane.xlu0 %121
    %v123 = vrot.slane %v122, 4
    %v124 = vadd.f32 %v122, %v123
    %v125 = vrot.slane %v124, 2
    %v126 = vadd.f32 %v124, %v125
    %v127 = vrot.slane %v126, 1
    %v128 = vadd.f32 %v126, %v127
    %s129 = vtos %v128
    %v130 = vstv %s129
    %v131 = vadd.f32 %v118, %v130
    %vm132 = vcmask 0
    %133 = vst.msk [vmem:[#allocation5] sm:$0x1] %vm132, %v131
    // Predicated region
    $region22: #{tpu_custom_call.1} parent=1 // pred_check
      %p134 = pneg %p52
    $region23: #{tpu_custom_call.1} parent=1 // pred_check_branch
      %136 = sbr.rel (%p134) target = $region25
    $region24: #{tpu_custom_call.1} parent=1 // pred_region
      %v137 = vld [vmem:[#allocation2] sm:$0x1]
      %138 = vst.msk [vmem:[#allocation11] sm:$0x1] %vm78, %v137
      %v139 = vld [vmem:[#allocation3] sm:$0x1]
      %140 = vst.msk [vmem:[#allocation11 + $0x1] sm:$0x1] %vm78, %v139
      %v141 = vld [vmem:[#allocation4] sm:$0x1]
      %142 = vst.msk [vmem:[#allocation11 + $0x2] sm:$0x1] %vm78, %v141
      %v143 = vld [vmem:[#allocation5] sm:$0x1]
      %145 = vset.pattern.permute.xlu0 0
      %146 = vperm.xlu0 %145, %v143
      %v147 = vpop.permute.xlu0 %146
      %v149 = vlaneseq
      %v150 = vshrl.u32 %v149, 7
      %v151 = vsub.s32 0, %v150
      %v152 = vrot.slane %v147, %v151
      %153 = vst.msk [vmem:[#allocation11 + $0x3] sm:$0x1] %vm78, %v152
    $region25: #{tpu_custom_call.1} parent=1 // pred_fallthru
      _
    // Predicated region
    $region26: #{tpu_custom_call.1} parent=1 // pred_check
      _
    $region27: #{tpu_custom_call.1} parent=1 // pred_check_branch
      %155 = sbr.rel (0) target = $region29
    $region28: #{tpu_custom_call.1} parent=1 // pred_region
      %s157 = ssub.s32 64, 64
      %158 = vsyncadd [#allocation8], %s157
      %s160 = sshll.u32 [#allocation11], 4
      %s161 = int_to_ptr.vmem [resolvable:$true] %s160
      %163 = dma.vmem_to_hbm [thread:$0]  %s161, 64, %s2, [#allocation8]
    $region29: #{tpu_custom_call.1} parent=1 // pred_fallthru
      _
    // Predicated region
    $region30: #{tpu_custom_call.1} parent=1 // pred_check
      _
    $region31: #{tpu_custom_call.1} parent=1 // pred_check_branch
      %165 = sbr.rel (0) target = $region33
    $region32: #{tpu_custom_call.1} parent=1 // pred_region
      %166 = dma.done [#allocation8], 64
    $region33: #{tpu_custom_call.1} parent=1 // pred_fallthru
      _
    %167 = vsyncpa [#allocation7], 1
    %168 = vsyncpa [#allocation10], 1
    %169 = vsyncpa [#allocation8], 1

</llo_original>
